<compile_context>
chip_gen: v5e
topology: v5e:2x2
jax: 0.10.0
libtpu: 0.0.40
codegen_flags: <defaults>
</compile_context>

<pallas_src>
import functools

import jax
import jax.numpy as jnp
from jax.experimental import pallas as pl
from jax.experimental.pallas import tpu as pltpu


_SUB_CHUNK_BYTES = 1 * 1024 * 1024    # cap for one f32 (sub_rows, C) copy in the inner loop
_F32_COPIES = 6                       # live f32 temporaries per sub-chunk (upcasts, exp, t*xm, ...)
_VMEM_SLACK_BYTES = 6 * 1024 * 1024   # headroom for Mosaic scratch / output / semaphores


def _round_up(x, m):
    return -(-x // m) * m


def _vmem_limit_bytes():
    """Per-chip scoped-VMEM request: ~3/4 of physical (48 MiB v7x, 96 MiB v5e/v6e)."""
    cap = 64 * 1024 * 1024
    try:
        cap = int(pltpu.get_tpu_info().vmem_capacity_bytes)
    except Exception:
        pass
    return int(min(cap * 3 // 4, 96 * 1024 * 1024))


def _choose_tiling(n, c, pred_dtype, tgt_dtype, vmem_limit):
    """Pick (block_rows, sub_rows, pack) for the batch tiling."""
    isz_p = jnp.dtype(pred_dtype).itemsize
    isz_t = jnp.dtype(tgt_dtype).itemsize
    # Sublane packing derived from the SMALLEST itemsize so both operands stay
    # on native (sublane, 128) boundaries: 8 rows f32, 16 bf16, 32 int8.
    pack = 8 * max(1, 4 // min(isz_p, isz_t, 4))

    # Inner compute sub-chunk: bound the f32 working set regardless of DMA tile.
    sub = max(pack, (_SUB_CHUNK_BYTES // (c * 4) // pack) * pack)
    sub = min(sub, _round_up(max(n, 1), pack))
    f32_working = _F32_COPIES * sub * c * 4

    # Outer DMA tile: 2 inputs x 2 pipeline buffers (storage dtype) get the
    # VMEM that remains after the f32 working set + slack.
    bytes_per_row_dma = 2 * c * (isz_p + isz_t)
    input_budget = vmem_limit - f32_working - _VMEM_SLACK_BYTES
    rows = max(sub, (input_budget // bytes_per_row_dma // sub) * sub)

    # Guard very large class counts (single-pass row LSE needs the whole row).
    # TODO(synk): add a class-chunked ("arbitrary") grid axis with online
    # max/LSE accumulation for huge C instead of raising.
    est = rows * bytes_per_row_dma + f32_working + _VMEM_SLACK_BYTES
    if est > vmem_limit:
        raise ValueError(
            f"C={c} too large for single-pass log-softmax tiling "
            f"(~{est >> 20} MiB VMEM needed, limit {vmem_limit >> 20} MiB)."
        )

    # Never exceed the batch (rounded to sub so the inner trip count is exact).
    n_sub = _round_up(max(n, 1), sub)
    rows = min(rows, n_sub)

    # Prefer >= 2 grid steps so the "parallel" axis can shard across the two
    # TensorCores on v7x (only when the batch is big enough to split).
    if rows >= n_sub and n_sub >= 2 * sub:
        rows = sub * ((n_sub // sub + 1) // 2)

    return int(rows), int(sub), int(pack)


def _rre_loss_kernel(pred_ref, tgt_ref, out_ref, *, n_total, block_rows, sub_rows):
    i = pl.program_id(0)
    num_sub = block_rows // sub_rows

    def body(j, acc):
        r0 = pl.multiple_of(j * sub_rows, sub_rows)
        x_raw = pred_ref[pl.ds(r0, sub_rows), :]                      # (sub, C)
        t = tgt_ref[pl.ds(r0, sub_rows), :].astype(jnp.float32)       # (sub, C)

        # Row max in the storage dtype (exact for bf16/f32); upcast only the
        # (sub, 1) column.  xm is computed once and reused by both passes.
        m = jnp.max(x_raw, axis=1, keepdims=True).astype(jnp.float32)
        xm = x_raw.astype(jnp.float32) - m                            # (sub, C)

        lse = jnp.log(jnp.sum(jnp.exp(xm), axis=1, keepdims=True))    # (sub, 1)
        sum_t = jnp.sum(t, axis=1, keepdims=True)                     # (sub, 1)
        t_xm = jnp.sum(t * xm, axis=1, keepdims=True)                 # (sub, 1)

        # sum_c(-t * log_softmax(x)) = sum(t) * lse - sum(t * (x - m))
        row_loss = sum_t * lse - t_xm                                 # (sub, 1)

        # Mask out-of-range tail rows (select, so NaN/Inf in padding is dropped).
        row_ids = (i * block_rows + j * sub_rows
                   + jax.lax.broadcasted_iota(jnp.int32, row_loss.shape, 0))
        row_loss = jnp.where(row_ids < n_total, row_loss, 0.0)
        return acc + jnp.sum(row_loss)

    partial = jax.lax.fori_loop(0, num_sub, body, jnp.float32(0.0),
                                unroll=bool(num_sub <= 4))

    # Lane 0 carries this block's partial; other lanes are zero so the wrapper
    # can sum the whole (num_blocks, 128) slab without a strided lane-0 gather.
    lane = jax.lax.broadcasted_iota(jnp.int32, out_ref.shape, 1)
    out_ref[...] = jnp.where(lane == 0, partial, 0.0).astype(jnp.float32)


def rre_loss(pred, target, *, block_rows=None, sub_rows=None):
    """Pallas implementation of _RRE_LOSS.forward for 2-D [N, C] inputs."""
    N, C = pred.shape
    assert target.shape == (N, C), (pred.shape, target.shape)

    vmem_limit = _vmem_limit_bytes()
    auto_rows, auto_sub, pack = _choose_tiling(N, C, pred.dtype, target.dtype,
                                               vmem_limit)
    if block_rows is None:
        block_rows = auto_rows
    if sub_rows is None:
        sub_rows = min(auto_sub, block_rows)
        # sub_rows must divide block_rows; shrink by the packing until it does.
        while block_rows % sub_rows and sub_rows > pack:
            sub_rows -= pack
        if block_rows % sub_rows:
            sub_rows = block_rows
    assert block_rows % sub_rows == 0, (block_rows, sub_rows)

    num_blocks = pl.cdiv(N, block_rows)

    partials = pl.pallas_call(
        functools.partial(_rre_loss_kernel, n_total=N,
                          block_rows=block_rows, sub_rows=sub_rows),
        out_shape=jax.ShapeDtypeStruct((num_blocks, 128), jnp.float32),
        grid=(num_blocks,),
        in_specs=[
            pl.BlockSpec((block_rows, C), lambda i: (i, 0)),
            pl.BlockSpec((block_rows, C), lambda i: (i, 0)),
        ],
        # Each grid step owns its own lane-dense output row -> no cross-step
        # state, so the batch axis can shard across v7x's two TensorCores.
        out_specs=pl.BlockSpec((1, 128), lambda i: (i, 0)),
        compiler_params=pltpu.CompilerParams(
            dimension_semantics=("parallel",),
            vmem_limit_bytes=int(vmem_limit),
        ),
    )(pred, target)

    # Non-lane-0 entries are exactly zero, so sum the whole slab + mean.
    return jnp.sum(partials) / jnp.float32(N)


def _reference(pred, target):
    log_sm = jax.nn.log_softmax(pred.astype(jnp.float32), axis=1)
    return jnp.mean(jnp.sum(-target.astype(jnp.float32) * log_sm, axis=1))


if __name__ == "__main__":
    key = jax.random.PRNGKey(0)
    k1, k2, k3, k4, k5, k6, k7, k8 = jax.random.split(key, 8)

    # Case 1: small, evenly tiled, auto tiling.
    N, C = 16, 32
    pred = jax.random.normal(k1, (N, C), dtype=jnp.float32)
    target = jax.nn.softmax(jax.random.normal(k2, (N, C), dtype=jnp.float32), axis=1)
    loss = jax.block_until_ready(rre_loss(pred, target))
    ref = _reference(pred, target)
    assert jnp.allclose(loss, ref, rtol=1e-5, atol=1e-5), (loss, ref)

    # Case 2: batch not divisible by the tile (exercises tail masking).
    N2, C2 = 19, 32
    pred2 = jax.random.normal(k3, (N2, C2), dtype=jnp.float32)
    target2 = jax.nn.softmax(jax.random.normal(k4, (N2, C2), dtype=jnp.float32), axis=1)
    loss2 = jax.block_until_ready(rre_loss(pred2, target2))
    ref2 = _reference(pred2, target2)
    assert jnp.allclose(loss2, ref2, rtol=1e-5, atol=1e-5), (loss2, ref2)

    # Case 3: multiple grid blocks + bf16 inputs kept bf16 across the boundary.
    N3, C3 = 40, 32
    pred3 = jax.random.normal(k5, (N3, C3), dtype=jnp.float32).astype(jnp.bfloat16)
    target3 = jax.nn.softmax(
        jax.random.normal(k6, (N3, C3), dtype=jnp.float32), axis=1
    ).astype(jnp.bfloat16)
    loss3 = jax.block_until_ready(rre_loss(pred3, target3, block_rows=16))
    ref3 = _reference(pred3, target3)
    assert jnp.allclose(loss3, ref3, rtol=2e-2, atol=2e-2), (loss3, ref3)

    # Case 4: multiple grid blocks AND multiple inner sub-chunks per block
    # (exercises the fori_loop path + tail masking inside the last block).
    N4, C4 = 150, 64
    pred4 = jax.random.normal(k7, (N4, C4), dtype=jnp.float32)
    target4 = jax.nn.softmax(jax.random.normal(k8, (N4, C4), dtype=jnp.float32), axis=1)
    loss4 = jax.block_until_ready(rre_loss(pred4, target4, block_rows=64, sub_rows=16))
    ref4 = _reference(pred4, target4)
    assert jnp.allclose(loss4, ref4, rtol=1e-4, atol=1e-4), (loss4, ref4)

    print("KERNEL_OK")
</pallas_src>

<mosaic_0001>
module attributes {stable_mosaic.version = 11 : i64} {
  func.func @_rre_loss_kernel(%arg0: i32, %arg1: memref<16x32xf32, #tpu.memory_space<vmem>>, %arg2: memref<16x32xf32, #tpu.memory_space<vmem>>, %arg3: memref<1x128xf32, #tpu.memory_space<vmem>>) attributes {dimension_semantics = [#tpu.dimension_semantics<parallel>], iteration_bounds = array<i64: 1>, scalar_prefetch = 0 : i64, scratch_operands = 0 : i64, tpu.core_type = #tpu.core_type<tc>, window_params = [{transform_indices = @transform_0, window_bounds = array<i64: 16, 32>}, {transform_indices = @transform_1, window_bounds = array<i64: 16, 32>}, {transform_indices = @transform_2, window_bounds = array<i64: 1, 128>}]} {
    %cst = arith.constant 0.000000e+00 : f32
    %c0_i32 = arith.constant 0 : i32
    %c16_i32 = arith.constant 16 : i32
    %0 = arith.muli %c0_i32, %c16_i32 : i32
    %1 = tpu.assume_multiple %0, 16 : i32
    %2 = arith.index_cast %1 : i32 to index
    %c0 = arith.constant 0 : index
    %3 = vector.load %arg1[%2, %c0] : memref<16x32xf32, #tpu.memory_space<vmem>>, vector<16x32xf32>
    %4 = arith.index_cast %1 : i32 to index
    %c0_0 = arith.constant 0 : index
    %5 = vector.load %arg2[%4, %c0_0] : memref<16x32xf32, #tpu.memory_space<vmem>>, vector<16x32xf32>
    %cst_1 = arith.constant dense<0xFF800000> : vector<16xf32>
    %6 = vector.multi_reduction <maximumf>, %3, %cst_1 [1] : vector<16x32xf32> to vector<16xf32>
    %7 = vector.shape_cast %6 : vector<16xf32> to vector<16x1xf32>
    %8 = vector.broadcast %7 : vector<16x1xf32> to vector<16x32xf32>
    %9 = arith.subf %3, %8 : vector<16x32xf32>
    %10 = math.exp %9 : vector<16x32xf32>
    %cst_2 = arith.constant dense<0.000000e+00> : vector<16xf32>
    %11 = vector.multi_reduction <add>, %10, %cst_2 [1] : vector<16x32xf32> to vector<16xf32>
    %12 = vector.shape_cast %11 : vector<16xf32> to vector<16x1xf32>
    %13 = math.log %12 : vector<16x1xf32>
    %cst_3 = arith.constant dense<0.000000e+00> : vector<16xf32>
    %14 = vector.multi_reduction <add>, %5, %cst_3 [1] : vector<16x32xf32> to vector<16xf32>
    %15 = vector.shape_cast %14 : vector<16xf32> to vector<16x1xf32>
    %16 = arith.mulf %5, %9 : vector<16x32xf32>
    %cst_4 = arith.constant dense<0.000000e+00> : vector<16xf32>
    %17 = vector.multi_reduction <add>, %16, %cst_4 [1] : vector<16x32xf32> to vector<16xf32>
    %18 = vector.shape_cast %17 : vector<16xf32> to vector<16x1xf32>
    %19 = arith.mulf %15, %13 : vector<16x1xf32>
    %20 = arith.subf %19, %18 : vector<16x1xf32>
    %c16_i32_5 = arith.constant 16 : i32
    %21 = arith.muli %arg0, %c16_i32_5 : i32
    %c16_i32_6 = arith.constant 16 : i32
    %22 = arith.muli %c0_i32, %c16_i32_6 : i32
    %23 = arith.addi %21, %22 : i32
    %24 = tpu.iota {dimensions = array<i32: 0>} : vector<16x1xi32>
    %25 = vector.broadcast %23 : i32 to vector<16x1xi32>
    %26 = arith.addi %25, %24 : vector<16x1xi32>
    %c16_i32_7 = arith.constant 16 : i32
    %27 = vector.broadcast %c16_i32_7 : i32 to vector<16x1xi32>
    %28 = arith.cmpi slt, %26, %27 : vector<16x1xi32>
    %cst_8 = arith.constant 0.000000e+00 : f32
    %29 = vector.broadcast %cst_8 : f32 to vector<16x1xf32>
    %30 = arith.select %28, %20, %29 : vector<16x1xi1>, vector<16x1xf32>
    %31 = vector.shape_cast %30 : vector<16x1xf32> to vector<1x16x1xf32>
    %cst_9 = arith.constant dense<0.000000e+00> : vector<1xf32>
    %32 = vector.multi_reduction <add>, %31, %cst_9 [1, 2] : vector<1x16x1xf32> to vector<1xf32>
    %33 = vector.shape_cast %32 : vector<1xf32> to vector<1x1x1xf32>
    %34 = vector.extract %33[0, 0, 0] : f32 from vector<1x1x1xf32>
    %35 = arith.addf %cst, %34 : f32
    %c1_i32 = arith.constant 1 : i32
    %36 = tpu.iota {dimensions = array<i32: 1>} : vector<1x128xi32>
    %c0_i32_10 = arith.constant 0 : i32
    %37 = vector.broadcast %c0_i32_10 : i32 to vector<1x128xi32>
    %38 = arith.cmpi eq, %36, %37 : vector<1x128xi32>
    %cst_11 = arith.constant 0.000000e+00 : f32
    %39 = vector.broadcast %35 : f32 to vector<1x128xf32>
    %40 = vector.broadcast %cst_11 : f32 to vector<1x128xf32>
    %41 = arith.select %38, %39, %40 : vector<1x128xi1>, vector<1x128xf32>
    %c0_12 = arith.constant 0 : index
    %c0_13 = arith.constant 0 : index
    %42 = vector.load %arg3[%c0_12, %c0_13] : memref<1x128xf32, #tpu.memory_space<vmem>>, vector<1x128xf32>
    tpu.vector_store %arg3[%c0_12, %c0_13], %41 {strides = array<i32>} : memref<1x128xf32, #tpu.memory_space<vmem>>, vector<1x128xf32>,
    return
  }
  func.func @transform_0(%arg0: i32) -> (i32, i32) {
    %c0_i32 = arith.constant 0 : i32
    %c0_i32_0 = arith.constant 0 : i32
    return %arg0, %c0_i32 : i32, i32
  }
  func.func @transform_1(%arg0: i32) -> (i32, i32) {
    %c0_i32 = arith.constant 0 : i32
    %c0_i32_0 = arith.constant 0 : i32
    return %arg0, %c0_i32 : i32, i32
  }
  func.func @transform_2(%arg0: i32) -> (i32, i32) {
    %c0_i32 = arith.constant 0 : i32
    %c0_i32_0 = arith.constant 0 : i32
    return %arg0, %c0_i32 : i32, i32
  }
}

</mosaic_0001>

<llo_original>
// kernel: tpu_custom_call.1
$region0: #{tpu_custom_call.1}
  #allocation0 [shape = 'u32[]', space=smem, size = 0x4, offset = 0x4, fixed_abs, tag = 'smem constant byte address 0x4 - core index']
  #allocation1 [shape = 'u32[72,128]{1,0:T(1,128)}', space=vmem, size = 0x9000, scoped, tag = 'internal scratch']
  %s0 = inlined_call_operand.hbm [shape: f32[16,32], index: 0, kind: input, shape index: {}]
  %s1 = inlined_call_operand.hbm [shape: f32[16,32], index: 1, kind: input, shape index: {}]
  %s2 = inlined_call_operand.hbm [shape: f32[1,128], index: 2, kind: output, shape index: {}]
  %s3 = sld [smem:[#allocation0]]
  $region26: #{tpu_custom_call.1} parent=0
    _
  %s5 = ssub.s32 1, %s3
  %s6 = scalar_select 0, %s5, %s3
  $region1: #{tpu_custom_call.1} parent=0
    #allocation2 [shape = 'u8[8192]{0}', space=vmem, size = 0x2000, scoped, tag = 'input window, operand 0, single buffered']
    #allocation3 [shape = 's32[1]{0}', space=sflag, size = 0x4, scoped, tag = 'scoped memory for tpu_custom_call.1']
    #allocation4 [shape = 's32[1]{0}', space=sflag, size = 0x4, scoped, tag = 'scoped memory for tpu_custom_call.1']
    #allocation5 [shape = 'u8[8192]{0}', space=vmem, size = 0x2000, scoped, tag = 'input window, operand 1, single buffered']
    #allocation6 [shape = 's32[1]{0}', space=sflag, size = 0x4, scoped, tag = 'scoped memory for tpu_custom_call.1']
    #allocation7 [shape = 'u8[512]{0}', space=vmem, size = 0x400, scoped, tag = 'output window, operand 0, single buffered']
    %7 = vsyncpa [#allocation3], 0
    %8 = vsyncpa [#allocation6], 0
    %9 = vsyncpa [#allocation4], 0
    // Predicated region
    $region2: #{tpu_custom_call.1} parent=1 // pred_check
      _
    $region3: #{tpu_custom_call.1} parent=1 // pred_check_branch
      %11 = sbr.rel (0) target = $region5
    $region4: #{tpu_custom_call.1} parent=1 // pred_region
      %13 = vsyncadd [#allocation3], 0
      %s14 = sshll.u32 %s0, 4
      %s15 = int_to_ptr.hbm [resolvable:$true] %s14
      %s16 = sshll.u32 [#allocation2], 4
      %s17 = int_to_ptr.vmem [resolvable:$true] %s16
      %22 = dma.hbm_to_vmem [thread:$0]  %s15, 256, %s17, [#allocation3], 128, 128, 8
    $region5: #{tpu_custom_call.1} parent=1 // pred_fallthru
      _
    // Predicated region
    $region6: #{tpu_custom_call.1} parent=1 // pred_check
      _
    $region7: #{tpu_custom_call.1} parent=1 // pred_check_branch
      %24 = sbr.rel (0) target = $region9
    $region8: #{tpu_custom_call.1} parent=1 // pred_region
      %26 = vsyncadd [#allocation6], 0
      %s27 = sshll.u32 %s1, 4
      %s28 = int_to_ptr.hbm [resolvable:$true] %s27
      %s29 = sshll.u32 [#allocation5], 4
      %s30 = int_to_ptr.vmem [resolvable:$true] %s29
      %35 = dma.hbm_to_vmem [thread:$0]  %s28, 256, %s30, [#allocation6], 128, 128, 8
    $region9: #{tpu_custom_call.1} parent=1 // pred_fallthru
      _
    // Predicated region
    $region10: #{tpu_custom_call.1} parent=1 // pred_check
      _
    $region11: #{tpu_custom_call.1} parent=1 // pred_check_branch
      %37 = sbr.rel (0) target = $region13
    $region12: #{tpu_custom_call.1} parent=1 // pred_region
      %39 = dma.done [#allocation3], 256
    $region13: #{tpu_custom_call.1} parent=1 // pred_fallthru
      _
    // Predicated region
    $region14: #{tpu_custom_call.1} parent=1 // pred_check
      _
    $region15: #{tpu_custom_call.1} parent=1 // pred_check_branch
      %41 = sbr.rel (0) target = $region17
    $region16: #{tpu_custom_call.1} parent=1 // pred_region
      %43 = dma.done [#allocation6], 256
    $region17: #{tpu_custom_call.1} parent=1 // pred_fallthru
      _
    %v44 = vld [vmem:[#allocation2] sm:$0xff]
    %v45 = vld [vmem:[#allocation2 + $0x8] sm:$0xff]
    %v46 = vld [vmem:[#allocation5] sm:$0xff]
    %v47 = vld [vmem:[#allocation5 + $0x8] sm:$0xff]
    %vm48 = vcmask 261120
    %v49 = vsel %vm48, %v44, -inf
    %50 = vmax.xlane.f32.xlu0 %v49
    %v51 = vpop.xlane.xlu0 %50
    %v52 = vsel %vm48, %v45, -inf
    %53 = vmax.xlane.f32.xlu0 %v52
    %v54 = vpop.xlane.xlu0 %53
    %v55 = vsub.f32 %v44, %v51
    %v56 = vsub.f32 %v45, %v54
    %v57 = vmul.f32 %v55, 1.442695
    %v58 = vpow.pop %v57
    %v59 = vmul.f32 %v56, 1.442695
    %v60 = vpow.pop %v59
    %v61 = vsel %vm48, %v58, 0.0
    %62 = vadd.xlane.f32.xlu0 %v61
    %v63 = vpop.xlane.xlu0 %62
    %v64 = vsel %vm48, %v60, 0.0
    %65 = vadd.xlane.f32.xlu0 %v64
    %v66 = vpop.xlane.xlu0 %65
    %v67 = vlog2.pop %v63
    %v68 = vmul.f32 %v67, 0.6931472
    %v69 = vlog2.pop %v66
    %v70 = vmul.f32 %v69, 0.6931472
    %v71 = vsel %vm48, %v46, 0.0
    %72 = vadd.xlane.f32.xlu0 %v71
    %v73 = vpop.xlane.xlu0 %72
    %v74 = vsel %vm48, %v47, 0.0
    %75 = vadd.xlane.f32.xlu0 %v74
    %v76 = vpop.xlane.xlu0 %75
    %v77 = vmul.f32 %v46, %v55
    %v78 = vmul.f32 %v47, %v56
    %v79 = vsel %vm48, %v77, 0.0
    %80 = vadd.xlane.f32.xlu0 %v79
    %v81 = vpop.xlane.xlu0 %80
    %v82 = vsel %vm48, %v78, 0.0
    %83 = vadd.xlane.f32.xlu0 %v82
    %v84 = vpop.xlane.xlu0 %83
    %v85 = vmul.f32 %v73, %v68
    %v86 = vmul.f32 %v76, %v70
    %v87 = vsub.f32 %v85, %v81
    %v88 = vsub.f32 %v86, %v84
    %s89 = smul.u32 0, 16
    %v90 = vlaneseq
    %v91 = vshrl.u32 %v90, 7
    %v92 = vadd.s32 %v91, 8
    %v93 = vstv %s89
    %v94 = vadd.s32 %v93, %v91
    %v95 = vadd.s32 %v93, %v92
    %vm96 = vcmp.lt.s32.totalorder %v94, 16
    %vm97 = vcmp.lt.s32.totalorder %v95, 16
    %v98 = vsel %vm96, %v87, 0.0
    %v99 = vsel %vm97, %v88, 0.0
    %vm100 = vcmask 7168
    %v101 = vsel %vm100, %v98, 0.0
    %v102 = vsel %vm100, %v99, 0.0
    %v103 = vadd.f32 %v101, %v102
    %104 = vadd.xlane.f32.xlu0 %v103
    %v105 = vpop.xlane.xlu0 %104
    %v106 = vrot.slane %v105, 4
    %v107 = vadd.f32 %v105, %v106
    %v108 = vrot.slane %v107, 2
    %v109 = vadd.f32 %v107, %v108
    %v110 = vrot.slane %v109, 1
    %v111 = vadd.f32 %v109, %v110
    %s112 = vtos %v111
    %s113 = sadd.f32 %s112, 0.0
    %v114 = vlaneseq
    %v115 = vand.u32 %v114, 127
    %vm116 = vcmp.eq.s32.totalorder %v115, 0
    %v117 = vstv %s113
    %v118 = vsel %vm116, %v117, 0.0
    %119 = vst [vmem:[#allocation7] sm:$0x1] %v118
    // Predicated region
    $region18: #{tpu_custom_call.1} parent=1 // pred_check
      _
    $region19: #{tpu_custom_call.1} parent=1 // pred_check_branch
      %121 = sbr.rel (0) target = $region21
    $region20: #{tpu_custom_call.1} parent=1 // pred_region
      %123 = vsyncadd [#allocation4], 0
      %s125 = sshll.u32 [#allocation7], 4
      %s126 = int_to_ptr.vmem [resolvable:$true] %s125
      %s127 = sshll.u32 %s2, 4
      %s128 = int_to_ptr.hbm [resolvable:$true] %s127
      %130 = dma.vmem_to_hbm [thread:$0]  %s126, 16, %s128, [#allocation4]
    $region21: #{tpu_custom_call.1} parent=1 // pred_fallthru
      _
    // Predicated region
    $region22: #{tpu_custom_call.1} parent=1 // pred_check
      _
    $region23: #{tpu_custom_call.1} parent=1 // pred_check_branch
      %132 = sbr.rel (0) target = $region25
    $region24: #{tpu_custom_call.1} parent=1 // pred_region
      %134 = dma.done [#allocation4], 16
    $region25: #{tpu_custom_call.1} parent=1 // pred_fallthru
      _
    %135 = vsyncpa [#allocation3], 1
    %136 = vsyncpa [#allocation6], 1
    %137 = vsyncpa [#allocation4], 1

</llo_original>
